<compile_context>
chip_gen: v7x
topology: tpu7x:2x2x1
jax: 0.10.0
libtpu: 0.0.40
codegen_flags: <defaults>
</compile_context>

<pallas_src>
import math

import jax
import jax.numpy as jnp
from jax import lax
from jax.experimental import pallas as pl
from jax.experimental.pallas import tpu as pltpu


_VMEM_LIMIT = 32 * 1024 * 1024  # safe on v5e (128 MiB phys), v6e (128 MiB), v7x (64 MiB)


# ------------------------------ tiling helpers ------------------------------
def _pick_tile(dim, preferred, min_tiles=1):
    """Largest preferred tile dividing `dim` (preferring >= min_tiles tiles).
    Falls back to the full dimension (legal as an 'equal full dim' block)."""
    fallback = None
    for t in preferred:
        if dim % t == 0:
            if fallback is None:
                fallback = t
            if dim // t >= min_tiles:
                return t
    return fallback if fallback is not None else dim


def _pick_head_group(h, d_k):
    """Heads per grid step: largest divisor G of h with G*d_k a multiple of 128
    (lane-dense output slab) and <= 512 lanes; else all heads (full-width block)."""
    for g in range(h, 0, -1):
        if h % g == 0:
            blk = g * d_k
            if blk <= 512 and blk % 128 == 0:
                return g
    return h


# ----------------------------- Linear kernel -------------------------------
def _linear_kernel(x_ref, w_ref, b_ref, o_ref, acc_ref):
    # grid = (M tiles, N tiles, K tiles); K is the innermost reduction axis.
    @pl.when(pl.program_id(2) == 0)
    def _():
        acc_ref[...] = jnp.zeros_like(acc_ref)

    acc_ref[...] += jnp.dot(
        x_ref[...], w_ref[...], preferred_element_type=jnp.float32
    )

    @pl.when(pl.program_id(2) == pl.num_programs(2) - 1)
    def _():
        o_ref[...] = (acc_ref[...] + b_ref[...].astype(jnp.float32)).astype(o_ref.dtype)


def linear(x2d, w_t, b):
    """x2d: (N, d_in), w_t: (d_in, d_out), b: (1, d_out) -> (N, d_out)."""
    N, d_in = x2d.shape
    d_out = w_t.shape[1]
    # min_tiles=2 so both TensorCores get row tiles on v7x when N allows it.
    tm = _pick_tile(N, (512, 256, 128, 64, 32, 16, 8), min_tiles=2)
    tn = _pick_tile(d_out, (512, 256, 128))
    tk = _pick_tile(d_in, (512, 256, 128))
    grid = (N // tm, d_out // tn, d_in // tk)
    return pl.pallas_call(
        _linear_kernel,
        out_shape=jax.ShapeDtypeStruct((N, d_out), x2d.dtype),
        grid=grid,
        in_specs=[
            pl.BlockSpec((tm, tk), lambda i, j, kk: (i, kk)),
            pl.BlockSpec((tk, tn), lambda i, j, kk: (kk, j)),
            pl.BlockSpec((1, tn), lambda i, j, kk: (0, j)),
        ],
        out_specs=pl.BlockSpec((tm, tn), lambda i, j, kk: (i, j)),
        scratch_shapes=[pltpu.VMEM((tm, tn), jnp.float32)],
        compiler_params=pltpu.CompilerParams(
            dimension_semantics=("parallel", "parallel", "arbitrary"),
            vmem_limit_bytes=_VMEM_LIMIT,
        ),
    )(x2d, w_t, b)


# ------------------------- Flash attention kernel ---------------------------
def _make_flash_kernel(G, d_k, tq, tk, has_mask, causal):
    def kernel(*refs):
        if has_mask:
            mask_ref, q_ref, k_ref, v_ref, o_ref, m_sc, l_sc, acc_sc = refs
        else:
            q_ref, k_ref, v_ref, o_ref, m_sc, l_sc, acc_sc = refs

        qi = pl.program_id(2)
        ki = pl.program_id(3)

        @pl.when(ki == 0)
        def _():
            m_sc[...] = jnp.full_like(m_sc, -jnp.inf)
            l_sc[...] = jnp.zeros_like(l_sc)
            acc_sc[...] = jnp.zeros_like(acc_sc)

        def compute():
            # Bias built in-kernel (VPU has slack); no f32 bias tensor from HBM.
            if has_mask:
                mvals = mask_ref[0].astype(jnp.float32)          # int8 -> f32
                bias = jnp.where(mvals == 0.0, -1e9, 0.0).astype(jnp.float32)
            elif causal:
                rows = qi * tq + lax.broadcasted_iota(jnp.int32, (tq, tk), 0)
                cols = ki * tk + lax.broadcasted_iota(jnp.int32, (tq, tk), 1)
                bias = jnp.where(cols <= rows, 0.0, -1e9).astype(jnp.float32)
            else:
                bias = None

            for g in range(G):                                   # static, small
                hs = g * d_k
                qg = q_ref[0, :, hs:hs + d_k]                    # (tq, d_k), scale pre-folded
                kg = k_ref[0, :, hs:hs + d_k]                    # (tk, d_k)
                vg = v_ref[0, :, hs:hs + d_k]                    # (tk, d_k)
                # trans-B contraction; no materialized k.T
                s = lax.dot_general(
                    qg, kg, (((1,), (1,)), ((), ())),
                    preferred_element_type=jnp.float32,
                )
                if bias is not None:
                    s = s + bias

                m_prev = m_sc[:, g:g + 1]
                l_prev = l_sc[:, g:g + 1]
                m_new = jnp.maximum(m_prev, s.max(axis=-1, keepdims=True))
                alpha = jnp.exp(m_prev - m_new)
                p = jnp.exp(s - m_new)                           # f32 softmax math
                l_sc[:, g:g + 1] = alpha * l_prev + p.sum(axis=-1, keepdims=True)
                acc_sc[:, hs:hs + d_k] = alpha * acc_sc[:, hs:hs + d_k] + jnp.dot(
                    p.astype(vg.dtype), vg, preferred_element_type=jnp.float32
                )
                m_sc[:, g:g + 1] = m_new

        if causal:
            # Skip K tiles entirely above the diagonal (dead for causal masks).
            pl.when(ki * tk <= qi * tq + (tq - 1))(compute)
        else:
            compute()

        @pl.when(ki == pl.num_programs(3) - 1)
        def _():
            for g in range(G):
                hs = g * d_k
                inv_l = pl.reciprocal(l_sc[:, g:g + 1], approx=True)
                o_ref[0, :, hs:hs + d_k] = (
                    acc_sc[:, hs:hs + d_k] * inv_l
                ).astype(o_ref.dtype)

    return kernel


def flash_attention(q, k, v, h, d_k, mask=None, causal=False):
    """q: (B, Sq, h*d_k), k/v: (B, Sk, h*d_k) head-minor layout (head i at
    columns [i*d_k, (i+1)*d_k)).  mask: (B, Sq, Sk) int8 (0 = masked) or None.
    Returns (B, Sq, h*d_k) in the same head-minor layout (no transposes needed)."""
    B, Sq, d_model = q.shape
    Sk = k.shape[1]
    assert d_model == h * d_k

    G = _pick_head_group(h, d_k)
    n_groups = h // G
    blk = G * d_k

    tq = _pick_tile(Sq, (256, 128, 64, 32, 16, 8))
    tk = _pick_tile(Sk, (512, 256, 128))     # >=128 or full Sk (mask block last dim)
    grid = (B, n_groups, Sq // tq, Sk // tk)

    q_spec = pl.BlockSpec((1, tq, blk), lambda b, hg, qi, ki: (b, qi, hg))
    k_spec = pl.BlockSpec((1, tk, blk), lambda b, hg, qi, ki: (b, ki, hg))
    v_spec = pl.BlockSpec((1, tk, blk), lambda b, hg, qi, ki: (b, ki, hg))
    o_spec = pl.BlockSpec((1, tq, blk), lambda b, hg, qi, ki: (b, qi, hg))
    scratch = [
        pltpu.VMEM((tq, G), jnp.float32),      # running max (per head)
        pltpu.VMEM((tq, G), jnp.float32),      # running sum (per head)
        pltpu.VMEM((tq, blk), jnp.float32),    # lane-dense output accumulator
    ]
    cparams = pltpu.CompilerParams(
        dimension_semantics=("parallel", "parallel", "parallel", "arbitrary"),
        vmem_limit_bytes=_VMEM_LIMIT,
    )
    out_shape = jax.ShapeDtypeStruct((B, Sq, d_model), q.dtype)

    has_mask = mask is not None
    kernel = _make_flash_kernel(G, d_k, tq, tk, has_mask, causal)
    if has_mask:
        m_spec = pl.BlockSpec((1, tq, tk), lambda b, hg, qi, ki: (b, qi, ki))
        in_specs = [m_spec, q_spec, k_spec, v_spec]
        args = (mask, q, k, v)
    else:
        in_specs = [q_spec, k_spec, v_spec]
        args = (q, k, v)

    return pl.pallas_call(
        kernel,
        out_shape=out_shape,
        grid=grid,
        in_specs=in_specs,
        out_specs=o_spec,
        scratch_shapes=scratch,
        compiler_params=cparams,
    )(*args)


# ---------------- Optional attention-probability kernel (debug) -------------
def _make_probs_kernel(has_mask):
    def kernel(*refs):
        if has_mask:
            mask_ref, q_ref, k_ref, p_ref = refs
        else:
            q_ref, k_ref, p_ref = refs
        q = q_ref[0, 0]                  # (tq, d_k), scale already folded into W_q
        k = k_ref[0, 0]                  # (Sk, d_k)
        s = lax.dot_general(
            q, k, (((1,), (1,)), ((), ())), preferred_element_type=jnp.float32
        )
        if has_mask:
            mvals = mask_ref[0].astype(jnp.float32)
            s = jnp.where(mvals == 0.0, -1e9, s)
        m = s.max(axis=-1, keepdims=True)
        e = jnp.exp(s - m)
        p = e / e.sum(axis=-1, keepdims=True)   # exact division on the parity path
        p_ref[0, 0] = p.astype(p_ref.dtype)

    return kernel


def attention_probs(q3, k3, h, d_k, mask=None):
    """Materializes (B, h, Sq, Sk) attention probabilities (PyTorch's self.attn).
    Debug/parity path only; the fast path never writes this O(S^2) tensor."""
    B, Sq, d_model = q3.shape
    Sk = k3.shape[1]
    # Head-major layout only for this debug path (XLA transpose acceptable here).
    qh = q3.reshape(B, Sq, h, d_k).transpose(0, 2, 1, 3)
    kh = k3.reshape(B, Sk, h, d_k).transpose(0, 2, 1, 3)

    tq = _pick_tile(Sq, (256, 128, 64, 32, 16, 8))
    grid = (B, h, Sq // tq)
    q_spec = pl.BlockSpec((1, 1, tq, d_k), lambda b, hh, qi: (b, hh, qi, 0))
    k_spec = pl.BlockSpec((1, 1, Sk, d_k), lambda b, hh, qi: (b, hh, 0, 0))
    p_spec = pl.BlockSpec((1, 1, tq, Sk), lambda b, hh, qi: (b, hh, qi, 0))
    cparams = pltpu.CompilerParams(
        dimension_semantics=("parallel", "parallel", "parallel"),
        vmem_limit_bytes=_VMEM_LIMIT,
    )
    out_shape = jax.ShapeDtypeStruct((B, h, Sq, Sk), jnp.float32)

    has_mask = mask is not None
    kernel = _make_probs_kernel(has_mask)
    if has_mask:
        m_spec = pl.BlockSpec((1, tq, Sk), lambda b, hh, qi: (b, qi, 0))
        in_specs = [m_spec, q_spec, k_spec]
        args = (mask, qh, kh)
    else:
        in_specs = [q_spec, k_spec]
        args = (qh, kh)

    return pl.pallas_call(
        kernel,
        out_shape=out_shape,
        grid=grid,
        in_specs=in_specs,
        out_specs=p_spec,
        compiler_params=cparams,
    )(*args)


# ----------------------- MultiHeadedAttention module ------------------------
def init_params(key, h, d_model, dtype=jnp.float32):
    """PyTorch-style params for the 4 nn.Linear layers: w (out, in), b (out,)."""
    assert d_model % h == 0
    params = []
    bound = 1.0 / math.sqrt(d_model)
    for i in range(4):
        kw, kb = jax.random.split(jax.random.fold_in(key, i))
        w = jax.random.uniform(kw, (d_model, d_model), dtype, -bound, bound)
        b = jax.random.uniform(kb, (d_model,), dtype, -bound, bound)
        params.append({"w": w, "b": b})
    return params


def prepare_params(params, h, d_model, compute_dtype=jnp.bfloat16):
    """One-time weight prep: transpose to (in, out), fold 1/sqrt(d_k) into the Q
    projection, pre-concatenate fused QKV / KV weights, cast to compute dtype."""
    assert d_model % h == 0
    d_k = d_model // h
    scale = 1.0 / math.sqrt(d_k)

    wq = (params[0]["w"].T * scale).astype(compute_dtype)
    bq = (params[0]["b"] * scale).astype(compute_dtype)[None, :]
    wk = params[1]["w"].T.astype(compute_dtype)
    bk = params[1]["b"].astype(compute_dtype)[None, :]
    wv = params[2]["w"].T.astype(compute_dtype)
    bv = params[2]["b"].astype(compute_dtype)[None, :]
    wo = params[3]["w"].T.astype(compute_dtype)
    bo = params[3]["b"].astype(compute_dtype)[None, :]

    return {
        "h": h, "d_model": d_model, "d_k": d_k, "dtype": compute_dtype,
        "wq": wq, "bq": bq, "wk": wk, "bk": bk, "wv": wv, "bv": bv,
        "wo": wo, "bo": bo,
        "wqkv": jnp.concatenate([wq, wk, wv], axis=1),
        "bqkv": jnp.concatenate([bq, bk, bv], axis=1),
        "wkv": jnp.concatenate([wk, wv], axis=1),
        "bkv": jnp.concatenate([bk, bv], axis=1),
    }


def multi_headed_attention(prepared, query, key, value, mask=None, causal=False,
                           return_attn=False):
    """query/key/value: (B, S, d_model). mask: (B, Sq, Sk) (0 = masked) or None.
    If causal=True, the causal mask is generated in-kernel (mask must be None).
    Returns out (B, Sq, d_model); if return_attn, also (B, H, Sq, Sk) f32 probs."""
    h = prepared["h"]
    d_model = prepared["d_model"]
    d_k = prepared["d_k"]
    cdtype = prepared["dtype"]
    B, Sq, _ = query.shape
    Sk = key.shape[1]

    q_in = query.astype(cdtype).reshape(B * Sq, d_model)
    k_in = key.astype(cdtype).reshape(B * Sk, d_model)
    v_in = value.astype(cdtype).reshape(B * Sk, d_model)

    # Fused projections when the same tensor feeds Q/K/V (self-attention).
    if (query is key) and (key is value):
        qkv = linear(q_in, prepared["wqkv"], prepared["bqkv"])
        q_p, k_p, v_p = jnp.split(qkv, 3, axis=1)
    elif key is value:
        q_p = linear(q_in, prepared["wq"], prepared["bq"])
        kv = linear(k_in, prepared["wkv"], prepared["bkv"])
        k_p, v_p = jnp.split(kv, 2, axis=1)
    else:
        q_p = linear(q_in, prepared["wq"], prepared["bq"])
        k_p = linear(k_in, prepared["wk"], prepared["bk"])
        v_p = linear(v_in, prepared["wv"], prepared["bv"])

    # Head-minor (B, S, H*d_k) layout kept throughout -> no XLA transposes.
    q3 = q_p.reshape(B, Sq, d_model)
    k3 = k_p.reshape(B, Sk, d_model)
    v3 = v_p.reshape(B, Sk, d_model)

    mask_i8 = None
    if (mask is not None) and (not causal):
        mask_i8 = (mask != 0).astype(jnp.int8)   # 1 byte/elem; expanded in-kernel

    x = flash_attention(q3, k3, v3, h, d_k, mask=mask_i8, causal=causal)
    out = linear(x.reshape(B * Sq, d_model), prepared["wo"], prepared["bo"])
    out = out.reshape(B, Sq, d_model)

    if return_attn:
        pm = mask_i8
        if causal:
            tri = jnp.tril(jnp.ones((Sq, Sk), jnp.int8))
            pm = jnp.broadcast_to(tri, (B, Sq, Sk))
        p_attn = attention_probs(q3, k3, h, d_k, mask=pm)
        return out, p_attn
    return out


# --------------------------------- Reference ---------------------------------
def _reference(params, h, query, key, value, mask=None):
    d_model = query.shape[-1]
    d_k = d_model // h
    B = query.shape[0]
    if mask is not None:
        mask = mask[:, None, :, :]

    def lin(p, x):
        return x @ p["w"].T + p["b"]

    def proj(p, x):
        return lin(p, x).reshape(B, -1, h, d_k).transpose(0, 2, 1, 3)

    q, k, v = proj(params[0], query), proj(params[1], key), proj(params[2], value)
    scores = jnp.einsum("bhqd,bhkd->bhqk", q, k) / math.sqrt(d_k)
    if mask is not None:
        scores = jnp.where(mask == 0, -1e9, scores)
    p = jax.nn.softmax(scores, axis=-1)
    x = jnp.einsum("bhqk,bhkd->bhqd", p, v)
    x = x.transpose(0, 2, 1, 3).reshape(B, -1, d_model)
    return lin(params[3], x), p


# ------------------------------------ Main ------------------------------------
if __name__ == "__main__":
    B, S, d_model, h = 2, 8, 32, 4
    root = jax.random.PRNGKey(0)
    kx, kq, kk, kv, kp = jax.random.split(root, 5)

    params = init_params(kp, h, d_model)

    # 1) self-attention, no mask, f32 compute (tight structural check;
    #    exercises fused QKV projection + flash path + probs parity kernel)
    prep32 = prepare_params(params, h, d_model, compute_dtype=jnp.float32)
    x = jax.random.normal(kx, (B, S, d_model), jnp.float32)
    out, p = multi_headed_attention(prep32, x, x, x, mask=None, return_attn=True)
    out = jax.block_until_ready(out)
    ref_out, ref_p = _reference(params, h, x, x, x, mask=None)
    assert jnp.allclose(out, ref_out, atol=5e-3, rtol=1e-2), "self-attn output mismatch"
    assert jnp.allclose(p, ref_p, atol=5e-3, rtol=1e-2), "self-attn probs mismatch"

    # 2) distinct q/k/v with an explicit (int8-expanded) mask, bf16 compute
    prep16 = prepare_params(params, h, d_model, compute_dtype=jnp.bfloat16)
    query = jax.random.normal(kq, (B, S, d_model), jnp.float32)
    key = jax.random.normal(kk, (B, S, d_model), jnp.float32)
    value = jax.random.normal(kv, (B, S, d_model), jnp.float32)
    causal_mask = jnp.broadcast_to(jnp.tril(jnp.ones((S, S), jnp.int32)), (B, S, S))
    out_m, p_m = multi_headed_attention(
        prep16, query, key, value, mask=causal_mask, return_attn=True
    )
    out_m = jax.block_until_ready(out_m)
    ref_out_m, ref_p_m = _reference(params, h, query, key, value, mask=causal_mask)
    assert jnp.allclose(out_m.astype(jnp.float32), ref_out_m, atol=8e-2, rtol=8e-2), \
        "masked output mismatch"
    assert jnp.allclose(p_m, ref_p_m, atol=4e-2, rtol=8e-2), "masked probs mismatch"

    # 3) in-kernel causal mask + dead-tile skip, bf16, self-attention
    out_c = multi_headed_attention(prep16, x, x, x, mask=None, causal=True)
    out_c = jax.block_until_ready(out_c)
    ref_out_c, _ = _reference(params, h, x, x, x, mask=causal_mask)
    assert jnp.allclose(out_c.astype(jnp.float32), ref_out_c, atol=8e-2, rtol=8e-2), \
        "causal output mismatch"

    print("KERNEL_OK")
</pallas_src>

<mosaic_0001>
module attributes {stable_mosaic.version = 11 : i64} {
  func.func @_linear_kernel(%arg0: i32, %arg1: i32, %arg2: i32, %arg3: memref<8x32xf32, #tpu.memory_space<vmem>>, %arg4: memref<32x96xf32, #tpu.memory_space<vmem>>, %arg5: memref<1x96xf32, #tpu.memory_space<vmem>>, %arg6: memref<8x96xf32, #tpu.memory_space<vmem>>, %arg7: memref<8x96xf32, #tpu.memory_space<vmem>>) attributes {dimension_semantics = [#tpu.dimension_semantics<parallel>, #tpu.dimension_semantics<parallel>, #tpu.dimension_semantics<arbitrary>], iteration_bounds = array<i64: 2, 1, 1>, scalar_prefetch = 0 : i64, scratch_operands = 1 : i64, tpu.core_type = #tpu.core_type<tc>, window_params = [{transform_indices = @transform_0, window_bounds = array<i64: 8, 32>}, {transform_indices = @transform_1, window_bounds = array<i64: 32, 96>}, {transform_indices = @transform_2, window_bounds = array<i64: 1, 96>}, {transform_indices = @transform_3, window_bounds = array<i64: 8, 96>}]} {
    %c0_i32 = arith.constant 0 : i32
    %0 = arith.cmpi eq, %arg2, %c0_i32 : i32
    %1 = arith.extui %0 : i1 to i32
    %c0_i32_0 = arith.constant 0 : i32
    %2 = arith.cmpi ne, %1, %c0_i32_0 : i32
    scf.if %2 {
      %cst_10 = arith.constant 0.000000e+00 : f32
      %12 = vector.broadcast %cst_10 : f32 to vector<8x96xf32>
      %c0_11 = arith.constant 0 : index
      %c0_12 = arith.constant 0 : index
      %13 = vector.load %arg7[%c0_11, %c0_12] : memref<8x96xf32, #tpu.memory_space<vmem>>, vector<8x96xf32>
      tpu.vector_store %arg7[%c0_11, %c0_12], %12 {strides = array<i32>} : memref<8x96xf32, #tpu.memory_space<vmem>>, vector<8x96xf32>,
    } else {
    }
    %c0 = arith.constant 0 : index
    %c0_1 = arith.constant 0 : index
    %3 = vector.load %arg7[%c0, %c0_1] : memref<8x96xf32, #tpu.memory_space<vmem>>, vector<8x96xf32>
    %c0_2 = arith.constant 0 : index
    %c0_3 = arith.constant 0 : index
    %4 = vector.load %arg3[%c0_2, %c0_3] : memref<8x32xf32, #tpu.memory_space<vmem>>, vector<8x32xf32>
    %c0_4 = arith.constant 0 : index
    %c0_5 = arith.constant 0 : index
    %5 = vector.load %arg4[%c0_4, %c0_5] : memref<32x96xf32, #tpu.memory_space<vmem>>, vector<32x96xf32>
    %cst = arith.constant dense<0.000000e+00> : vector<8x96xf32>
    %6 = tpu.matmul %4, %5, %cst {dimension_numbers = #tpu.dot_dimension_numbers<[1], [0], [0], [1], [0, 0, 1, 1], [], []>} : vector<8x32xf32>, vector<32x96xf32>, vector<8x96xf32> -> vector<8x96xf32>
    %7 = arith.addf %3, %6 : vector<8x96xf32>
    %c0_6 = arith.constant 0 : index
    %c0_7 = arith.constant 0 : index
    %8 = vector.load %arg7[%c0_6, %c0_7] : memref<8x96xf32, #tpu.memory_space<vmem>>, vector<8x96xf32>
    tpu.vector_store %arg7[%c0_6, %c0_7], %7 {strides = array<i32>} : memref<8x96xf32, #tpu.memory_space<vmem>>, vector<8x96xf32>,
    %c0_i32_8 = arith.constant 0 : i32
    %9 = arith.cmpi eq, %arg2, %c0_i32_8 : i32
    %10 = arith.extui %9 : i1 to i32
    %c0_i32_9 = arith.constant 0 : i32
    %11 = arith.cmpi ne, %10, %c0_i32_9 : i32
    scf.if %11 {
      %c0_10 = arith.constant 0 : index
      %c0_11 = arith.constant 0 : index
      %12 = vector.load %arg7[%c0_10, %c0_11] : memref<8x96xf32, #tpu.memory_space<vmem>>, vector<8x96xf32>
      %c0_12 = arith.constant 0 : index
      %c0_13 = arith.constant 0 : index
      %13 = vector.load %arg5[%c0_12, %c0_13] : memref<1x96xf32, #tpu.memory_space<vmem>>, vector<1x96xf32>
      %14 = vector.broadcast %13 : vector<1x96xf32> to vector<8x96xf32>
      %15 = arith.addf %12, %14 : vector<8x96xf32>
      %c0_14 = arith.constant 0 : index
      %c0_15 = arith.constant 0 : index
      %16 = vector.load %arg6[%c0_14, %c0_15] : memref<8x96xf32, #tpu.memory_space<vmem>>, vector<8x96xf32>
      tpu.vector_store %arg6[%c0_14, %c0_15], %15 {strides = array<i32>} : memref<8x96xf32, #tpu.memory_space<vmem>>, vector<8x96xf32>,
    } else {
    }
    return
  }
  func.func @transform_0(%arg0: i32, %arg1: i32, %arg2: i32) -> (i32, i32) {
    %c0_i32 = arith.constant 0 : i32
    return %arg0, %arg2 : i32, i32
  }
  func.func @transform_1(%arg0: i32, %arg1: i32, %arg2: i32) -> (i32, i32) {
    %c0_i32 = arith.constant 0 : i32
    return %arg2, %arg1 : i32, i32
  }
  func.func @transform_2(%arg0: i32, %arg1: i32, %arg2: i32) -> (i32, i32) {
    %c0_i32 = arith.constant 0 : i32
    %c0_i32_0 = arith.constant 0 : i32
    return %c0_i32, %arg1 : i32, i32
  }
  func.func @transform_3(%arg0: i32, %arg1: i32, %arg2: i32) -> (i32, i32) {
    %c0_i32 = arith.constant 0 : i32
    return %arg0, %arg1 : i32, i32
  }
}

</mosaic_0001>

<llo_original>
// kernel: tpu_custom_call.1
$region0: #{tpu_custom_call.1}
  #allocation0 [shape = 'u32[]', space=smem, size = 0x4, offset = 0x4, fixed_abs, tag = 'smem constant byte address 0x4 - core index']
  #allocation1 [shape = 'u32[144,128]{1,0:T(1,128)}', space=vmem, size = 0x12000, scoped, tag = 'internal scratch']
  #allocation2 [shape = 'f32[8,96]{1,0:T(8,128)}', space=vmem, size = 0x1000, scoped, tag = 'scratch operand']
  %s0 = inlined_call_operand.hbm [shape: f32[16,32], index: 0, kind: input, shape index: {}]
  %s1 = inlined_call_operand.hbm [shape: f32[32,96], index: 1, kind: input, shape index: {}]
  %s2 = inlined_call_operand.vmem [shape: f32[1,96], index: 2, kind: input, shape index: {}]
  %s3 = inlined_call_operand.hbm [shape: f32[16,96], index: 3, kind: output, shape index: {}]
  %s4 = sld [smem:[#allocation0]]
  $region61: #{tpu_custom_call.1} parent=0
    _
  %s6 = ssub.s32 1, %s4
  %s7 = scalar_select 0, %s6, %s4
  $region1: #{tpu_custom_call.1} parent=0
    #allocation3 [shape = 'u8[8192]{0}', space=vmem, size = 0x2000, scoped, tag = 'input window, operand 0']
    #allocation4 [shape = 's32[2]{0}', space=sflag, size = 0x8, scoped, tag = 'scoped memory for tpu_custom_call.1']
    #allocation5 [shape = 's32[2]{0}', space=sflag, size = 0x8, scoped, tag = 'scoped memory for tpu_custom_call.1']
    #allocation6 [shape = 'u8[16384]{0}', space=vmem, size = 0x4000, scoped, tag = 'input window, operand 1, single buffered']
    #allocation7 [shape = 's32[1]{0}', space=sflag, size = 0x4, scoped, tag = 'scoped memory for tpu_custom_call.1']
    #allocation8 [shape = 'u8[8192]{0}', space=vmem, size = 0x2000, scoped, tag = 'output window, operand 0']
    %8 = vsyncpa [#allocation4], 0
    %s9 = scalar_lea.sflag [#allocation4], 1
    %10 = vsyncpa %s9, 0
    %11 = vsyncpa [#allocation7], 0
    %12 = vsyncpa [#allocation5], 0
    %s13 = scalar_lea.sflag [#allocation5], 1
    %14 = vsyncpa %s13, 0
    loop: start=0, step=1, limit=4
    $region2: #{tpu_custom_call.1} parent=1 // loop_pre_header
      _
    $region3: #{tpu_custom_call.1} parent=1 // loop_header
      %s16 = sphi 0, %s20
      %p17 = scmp.ge.s32.totalorder %s16, 4
      %s23 = sphi 0, %s42
      %s24 = sphi 0, %s38
      %s25 = sphi 0, %s34
      %s26 = sphi 0, %s23
      %s27 = sphi 0, %s24
      %s28 = sphi 0, %s25
      %s29 = sphi 0, %s26
      %s30 = sphi 0, %s27
      %s31 = sphi 0, %s28
      %s47 = sphi 0, %s49
      %s50 = sphi 0, %s47
      %s51 = sphi 0, %s50
      %s67 = sphi 0, %s51
      %s75 = sphi 0, %s77
      %s78 = sphi 0, %s75
      %s79 = sphi 0, %s78
      %s95 = sphi 0, %s79
      %s101 = sphi 0, %s103
      %s104 = sphi 0, %s101
      %s105 = sphi 0, %s104
      %s121 = sphi 0, %s105
      %s129 = sphi 0, %s131
      %s132 = sphi 0, %s129
      %s133 = sphi 0, %s132
      %s149 = sphi 0, %s133
    $region4: #{tpu_custom_call.1} parent=1 // loop_header_branch
      %19 = sbr.rel (%p17) target = $region8
    $region5: #{tpu_custom_call.1} parent=1 // loop_body
      %s21 = ssub.s32 %s16, 1
      %s22 = ssub.s32 %s16, 2
      %s32 = sadd.s32 1, %s25
      %p33 = scmp.ge.s32.totalorder %s32, 1
      %s34 = scalar_select %p33, 0, %s32
      %s35 = sadd.s32 1, %s24
      %s36 = scalar_select %p33, %s35, %s24
      %p37 = scmp.ge.s32.totalorder %s36, 1
      %s38 = scalar_select %p37, 0, %s36
      %s39 = sadd.s32 1, %s23
      %s40 = scalar_select %p37, %s39, %s23
      %p41 = scmp.ge.s32.totalorder %s40, 2
      %s42 = scalar_select %p41, 0, %s40
      %s43 = ssub.s32 %s23, %s42
      %s44 = ssub.s32 %s25, %s34
      %s45 = sor.u32 %s43, %s44
      %p46 = scmp.eq.s32.totalorder %s45, 0
      %s48 = sadd.s32 %s47, 1
      %s49 = scalar_select %p46, %s47, %s48
      %p52 = pneg %p46
      %p53 = scmp.eq.s32.totalorder %s16, 1
      %p54 = por %p52, %p53
      %p55 = scmp.ne.s32.totalorder %s47, %s50
      %p56 = scmp.eq.s32.totalorder %s16, 0
      %p57 = por %p55, %p56
      %p58 = scmp.ne.s32.totalorder %s47, %s50
      %p59 = scmp.eq.s32.totalorder %s21, 1
      %p60 = por %p58, %p59
      %p61 = scmp.ne.s32.totalorder %s50, %s51
      %p62 = scmp.eq.s32.totalorder %s21, 0
      %p63 = por %p61, %p62
      %p64 = scmp.ne.s32.totalorder %s50, %s51
      %p65 = scmp.eq.s32.totalorder %s22, 1
      %p66 = por %p64, %p65
      %p68 = scmp.ne.s32.totalorder %s51, %s67
      %p69 = scmp.eq.s32.totalorder %s22, 0
      %p70 = por %p68, %p69
      %s71 = ssub.s32 %s25, %s34
      %s72 = ssub.s32 %s24, %s38
      %s73 = sor.u32 %s71, %s72
      %p74 = scmp.eq.s32.totalorder %s73, 0
      %s76 = sadd.s32 %s75, 1
      %s77 = scalar_select %p74, %s75, %s76
      %p80 = pneg %p74
      %p81 = scmp.eq.s32.totalorder %s16, 1
      %p82 = por %p80, %p81
      %p83 = scmp.ne.s32.totalorder %s75, %s78
      %p84 = scmp.eq.s32.totalorder %s16, 0
      %p85 = por %p83, %p84
      %p86 = scmp.ne.s32.totalorder %s75, %s78
      %p87 = scmp.eq.s32.totalorder %s21, 1
      %p88 = por %p86, %p87
      %p89 = scmp.ne.s32.totalorder %s78, %s79
      %p90 = scmp.eq.s32.totalorder %s21, 0
      %p91 = por %p89, %p90
      %p92 = scmp.ne.s32.totalorder %s78, %s79
      %p93 = scmp.eq.s32.totalorder %s22, 1
      %p94 = por %p92, %p93
      %p96 = scmp.ne.s32.totalorder %s79, %s95
      %p97 = scmp.eq.s32.totalorder %s22, 0
      %p98 = por %p96, %p97
      %s99 = ssub.s32 %s24, %s38
      %p100 = scmp.eq.s32.totalorder %s99, 0
      %s102 = sadd.s32 %s101, 1
      %s103 = scalar_select %p100, %s101, %s102
      %p106 = pneg %p100
      %p107 = scmp.eq.s32.totalorder %s16, 1
      %p108 = por %p106, %p107
      %p109 = scmp.ne.s32.totalorder %s101, %s104
      %p110 = scmp.eq.s32.totalorder %s16, 0
      %p111 = por %p109, %p110
      %p112 = scmp.ne.s32.totalorder %s101, %s104
      %p113 = scmp.eq.s32.totalorder %s21, 1
      %p114 = por %p112, %p113
      %p115 = scmp.ne.s32.totalorder %s104, %s105
      %p116 = scmp.eq.s32.totalorder %s21, 0
      %p117 = por %p115, %p116
      %p118 = scmp.ne.s32.totalorder %s104, %s105
      %p119 = scmp.eq.s32.totalorder %s22, 1
      %p120 = por %p118, %p119
      %p122 = scmp.ne.s32.totalorder %s105, %s121
      %p123 = scmp.eq.s32.totalorder %s22, 0
      %p124 = por %p122, %p123
      %s125 = ssub.s32 %s23, %s42
      %s126 = ssub.s32 %s24, %s38
      %s127 = sor.u32 %s125, %s126
      %p128 = scmp.eq.s32.totalorder %s127, 0
      %s130 = sadd.s32 %s129, 1
      %s131 = scalar_select %p128, %s129, %s130
      %p134 = pneg %p128
      %p135 = scmp.eq.s32.totalorder %s16, 1
      %p136 = por %p134, %p135
      %p137 = scmp.ne.s32.totalorder %s129, %s132
      %p138 = scmp.eq.s32.totalorder %s16, 0
      %p139 = por %p137, %p138
      %p140 = scmp.ne.s32.totalorder %s129, %s132
      %p141 = scmp.eq.s32.totalorder %s21, 1
      %p142 = por %p140, %p141
      %p143 = scmp.ne.s32.totalorder %s132, %s133
      %p144 = scmp.eq.s32.totalorder %s21, 0
      %p145 = por %p143, %p144
      %p146 = scmp.ne.s32.totalorder %s132, %s133
      %p147 = scmp.eq.s32.totalorder %s22, 1
      %p148 = por %p146, %p147
      %p150 = scmp.ne.s32.totalorder %s133, %s149
      %p151 = scmp.eq.s32.totalorder %s22, 0
      %p152 = por %p150, %p151
      %p153 = scmp.le.s32.totalorder 1, %s16
      %p154 = scmp.lt.s32.totalorder %s16, 3
      %p155 = pnand %p153, %p154
      %p156 = pneg %p155
      // Predicated region
      $region9: #{tpu_custom_call.1} parent=5 // pred_check
        _
      $region10: #{tpu_custom_call.1} parent=5 // pred_check_branch
        %158 = sbr.rel (%p155) target = $region12
      $region11: #{tpu_custom_call.1} parent=5 // pred_region
        %s159 = ssub.s32 %s16, 1
        // Predicated region
        $region13: #{tpu_custom_call.1} parent=11 // pred_check
          %p160 = pneg %p91
        $region14: #{tpu_custom_call.1} parent=11 // pred_check_branch
          %162 = sbr.rel (%p160) target = $region16
        $region15: #{tpu_custom_call.1} parent=11 // pred_region
          %s163 = smul.u32 4, %s28
          %s165 = ssub.s32 512, 512
          %166 = vsyncadd [#allocation7], %s165
          %s167 = sadd.s32 %s27, %s163
          %s168 = smul.addr %s167, 128
          %s169 = scalar_lea.hbm %s1, %s168
          %s170 = sshll.u32 [#allocation6], 4
          %s171 = int_to_ptr.vmem [resolvable:$true] %s170
          %176 = dma.hbm_to_vmem [thread:$0]  %s169, 512, %s171, [#allocation7], 128, 128, 8
        $region16: #{tpu_custom_call.1} parent=11 // pred_fallthru
          _
        // Predicated region
        $region17: #{tpu_custom_call.1} parent=11 // pred_check
          %p177 = pneg %p117
        $region18: #{tpu_custom_call.1} parent=11 // pred_check_branch
          %179 = sbr.rel (%p177) target = $region20
        $region19: #{tpu_custom_call.1} parent=11 // pred_region
          %p180 = scmp.lt.s32.totalorder %s27, 0
          %s181 = scalar_select %p180, %s27, 0
          %s182 = scalar_lea.vmem %s2, %s181
        $region20: #{tpu_custom_call.1} parent=11 // pred_fallthru
          _
      $region12: #{tpu_custom_call.1} parent=5 // pred_fallthru
        _
      %p183 = scmp.lt.s32.totalorder %s16, 2
      // Predicated region
      $region21: #{tpu_custom_call.1} parent=5 // pred_check
        %p184 = pneg %p183
      $region22: #{tpu_custom_call.1} parent=5 // pred_check_branch
        %186 = sbr.rel (%p184) target = $region24
      $region23: #{tpu_custom_call.1} parent=5 // pred_region
        // Predicated region
        $region25: #{tpu_custom_call.1} parent=23 // pred_check
          %p187 = pneg %p57
        $region26: #{tpu_custom_call.1} parent=23 // pred_check_branch
          %189 = sbr.rel (%p187) target = $region28
        $region27: #{tpu_custom_call.1} parent=23 // pred_region
          %s190 = sand.u32 %s47, 1
          %s191 = scalar_lea.sflag [#allocation4], %s190
          %s192 = sand.u32 %s47, 1
          %s193 = smul.addr %s192, 8
          %s194 = scalar_lea.vmem [#allocation3], %s193
          %s196 = ssub.s32 128, 128
          %197 = vsyncadd %s191, %s196
          %s198 = sadd.s32 %s25, %s23
          %s199 = smul.addr %s198, 128
          %s200 = scalar_lea.hbm %s0, %s199
          %s202 = sshll.u32 %s194, 4
          %s203 = int_to_ptr.vmem [resolvable:$true] %s202
          %205 = dma.hbm_to_vmem [thread:$0]  %s200, 128, %s203, %s191
        $region28: #{tpu_custom_call.1} parent=23 // pred_fallthru
          _
      $region24: #{tpu_custom_call.1} parent=5 // pred_fallthru
        _
      %p206 = scmp.le.s32.totalorder 1, %s16
      %p207 = scmp.lt.s32.totalorder %s16, 3
      %p208 = pnand %p206, %p207
      %p209 = pneg %p208
      // Predicated region
      $region29: #{tpu_custom_call.1} parent=5 // pred_check
        _
      $region30: #{tpu_custom_call.1} parent=5 // pred_check_branch
        %211 = sbr.rel (%p208) target = $region32
      $region31: #{tpu_custom_call.1} parent=5 // pred_region
        %s212 = ssub.s32 %s16, 1
        %s213 = sand.u32 %s50, 1
        %s214 = scalar_lea.sflag [#allocation4], %s213
        %s215 = sand.u32 %s50, 1
        %s216 = smul.addr %s215, 8
        %s217 = scalar_lea.vmem [#allocation3], %s216
        // Predicated region
        $region33: #{tpu_custom_call.1} parent=31 // pred_check
          %p218 = pneg %p63
        $region34: #{tpu_custom_call.1} parent=31 // pred_check_branch
          %220 = sbr.rel (%p218) target = $region36
        $region35: #{tpu_custom_call.1} parent=31 // pred_region
          %221 = dma.done %s214, 128
        $region36: #{tpu_custom_call.1} parent=31 // pred_fallthru
          _
        // Predicated region
        $region37: #{tpu_custom_call.1} parent=31 // pred_check
          %p222 = pneg %p91
        $region38: #{tpu_custom_call.1} parent=31 // pred_check_branch
          %224 = sbr.rel (%p222) target = $region40
        $region39: #{tpu_custom_call.1} parent=31 // pred_region
          %225 = dma.done [#allocation7], 512
        $region40: #{tpu_custom_call.1} parent=31 // pred_fallthru
          _
        %s226 = sand.u32 %s50, 1
        %s227 = scalar_lea.sflag [#allocation4], %s226
        %s228 = sand.u32 %s50, 1
        %s229 = smul.addr %s228, 8
        %s230 = scalar_lea.vmem [#allocation3], %s229
        %p231 = pneg %p63
        %p232 = pneg %p60
        %p233 = pneg %p91
        %p234 = pneg %p88
        %p235 = scmp.lt.s32.totalorder %s27, 0
        %s236 = scalar_select %p235, %s27, 0
        %s237 = scalar_lea.vmem %s2, %s236
        %p238 = pneg %p117
        %p239 = pneg %p114
        %p240 = pneg %p145
        %p241 = pneg %p142
        %s242 = sand.u32 %s132, 1
        %s243 = scalar_lea.sflag [#allocation5], %s242
        %s244 = sand.u32 %s132, 1
        %s245 = smul.addr %s244, 8
        %s246 = scalar_lea.vmem [#allocation8], %s245
        %s247 = smul.u32 4, %s28
        %p248 = scmp.lt.s32.totalorder %s27, 0
        %s249 = scalar_select %p248, %s27, 0
        %s250 = scalar_lea.vmem %s2, %s249
        %p251 = scmp.eq.s32.totalorder %s28, 0
        // Predicated region
        $region41: #{tpu_custom_call.1} parent=31 // pred_check
          %p252 = pneg %p251
        $region42: #{tpu_custom_call.1} parent=31 // pred_check_branch
          %254 = sbr.rel (%p252) target = $region44
        $region43: #{tpu_custom_call.1} parent=31 // pred_region
          %vm255 = vcmask 785408
          %256 = vst.msk [vmem:[#allocation2] sm:$0xff] %vm255, 0.0
        $region44: #{tpu_custom_call.1} parent=31 // pred_fallthru
          _
        %v257 = vld [vmem:[#allocation2] sm:$0xff]
        %v258 = vld [vmem:[%s217] sm:$0xff]
        %v259 = vld [vmem:[#allocation6] sm:$0xff]
        %v260 = vld [vmem:[#allocation6 + $0x8] sm:$0xff]
        %v261 = vld [vmem:[#allocation6 + $0x10] sm:$0xff]
        %v262 = vld [vmem:[#allocation6 + $0x18] sm:$0xff]
        %vm263 = vcmask 261120
        %v265 = vsel %vm263, %v258, 0
        %267 = vmatprep.subr.mxu0 0.0
        %268 = vmatpush1.msra.mxu0 %v259
        %269 = vmatprep.subr.mxu0 0.0
        %270 = vmatpush1.msra.mxu0 %v260
        %271 = vmatprep.subr.mxu0 0.0
        %272 = vmatpush1.msra.mxu0 %v261
        %273 = vmatprep.subr.mxu0 0.0
        %274 = vmatpush1.msra.mxu0 %v262
        %275 = vmatprep.subr.mxu0 0.0
        %276 = vmatpush1.msra.mxu0 0.0
        %277 = vmatprep.subr.mxu0 0.0
        %278 = vmatpush1.msra.mxu0 0.0
        %279 = vmatprep.subr.mxu0 0.0
        %280 = vmatpush1.msra.mxu0 0.0
        %281 = vmatprep.subr.mxu0 0.0
        %282 = vmatpush1.msra.mxu0 0.0
        %283 = vmatprep.subr.mxu0 0.0
        %284 = vmatpush1.msra.mxu0 0.0
        %285 = vmatprep.subr.mxu0 0.0
        %286 = vmatpush1.msra.mxu0 0.0
        %287 = vmatprep.subr.mxu0 0.0
        %288 = vmatpush1.msra.mxu0 0.0
        %289 = vmatprep.subr.mxu0 0.0
        %290 = vmatpush1.msra.mxu0 0.0
        %291 = vmatprep.subr.mxu0 0.0
        %292 = vmatpush1.msra.mxu0 0.0
        %293 = vmatprep.subr.mxu0 0.0
        %294 = vmatpush1.msra.mxu0 0.0
        %295 = vmatprep.subr.mxu0 0.0
        %296 = vmatpush1.msra.mxu0 0.0
        %297 = vmatprep.subr.mxu0 0.0
        %298 = vmatpush1.msra.mxu0 0.0
        %299 = vmatprep.subr.mxu0 0.0
        %300 = vmatpush1.msra.mxu0 0.0
        %301 = vmatprep.subr.mxu0 0.0
        %302 = vmatpush1.msra.mxu0 0.0
        %303 = vmatprep.subr.mxu0 0.0
        %304 = vmatpush1.msra.mxu0 0.0
        %305 = vmatprep.subr.mxu0 0.0
        %306 = vmatpush1.msra.mxu0 0.0
        %307 = vmatprep.subr.mxu0 0.0
        %308 = vmatpush1.msra.mxu0 0.0
        %309 = vmatprep.subr.mxu0 0.0
        %310 = vmatpush1.msra.mxu0 0.0
        %311 = vmatprep.subr.mxu0 0.0
        %312 = vmatpush1.msra.mxu0 0.0
        %313 = vmatprep.subr.mxu0 0.0
        %314 = vmatpush1.msra.mxu0 0.0
        %315 = vmatprep.subr.mxu0 0.0
        %316 = vmatpush1.msra.mxu0 0.0
        %317 = vmatprep.subr.mxu0 0.0
        %318 = vmatpush1.msra.mxu0 0.0
        %319 = vmatprep.subr.mxu0 0.0
        %320 = vmatpush1.msra.mxu0 0.0
        %321 = vmatprep.subr.mxu0 0.0
        %322 = vmatpush1.msra.mxu0 0.0
        %323 = vmatprep.subr.mxu0 0.0
        %324 = vmatpush1.msra.mxu0 0.0
        %325 = vmatprep.subr.mxu0 0.0
        %326 = vmatpush1.msra.mxu0 0.0
        %327 = vmatprep.subr.mxu0 0.0
        %328 = vmatpush1.msra.mxu0 0.0
        %329 = vmatprep.subr.mxu0 0.0
        %330 = vmatpush1.msra.mxu0 0.0
        %331 = vmatprep.mubr.f32.mxu0 0.0
        %332 = vmatmul.mubr.f32.gmra.mrb[0].mxu0 %v265
        %v333 = vpop.f32.mrb[0].mxu0
        %v334 = vadd.f32 0.0, %v333
        %v335 = vpop.f32.mrb[0].mxu0
        %336 = vdwg.mxu0
        %v337 = vadd.f32 %v257, %v334
        %vm338 = vcmask 785408
        %339 = vst.msk [vmem:[#allocation2] sm:$0xff] %vm338, %v337
        // Predicated region
        $region45: #{tpu_custom_call.1} parent=31 // pred_check
          %p340 = pneg %p251
        $region46: #{tpu_custom_call.1} parent=31 // pred_check_branch
          %342 = sbr.rel (%p340) target = $region48
        $region47: #{tpu_custom_call.1} parent=31 // pred_region
          %v343 = vld [vmem:[#allocation2] sm:$0xff]
          %v344 = vld [vmem:[%s250] sm:$0x1]
          %v346 = vlaneseq
          %v347 = vshrl.u32 %v346, 7
          %v348 = vsub.s32 0, %v347
          %v349 = vrot.slane %v344, %v348
          %v351 = vadd.f32 %v343, %v349
          %352 = vst.msk [vmem:[%s246] sm:$0xff] %vm338, %v351
        $region48: #{tpu_custom_call.1} parent=31 // pred_fallthru
          _
        %s353 = sand.u32 %s132, 1
        %s354 = scalar_lea.sflag [#allocation5], %s353
        %s355 = sand.u32 %s132, 1
        %s356 = smul.addr %s355, 8
        %s357 = scalar_lea.vmem [#allocation8], %s356
        // Predicated region
        $region49: #{tpu_custom_call.1} parent=31 // pred_check
          %p358 = pneg %p142
        $region50: #{tpu_custom_call.1} parent=31 // pred_check_branch
          %360 = sbr.rel (%p358) target = $region52
        $region51: #{tpu_custom_call.1} parent=31 // pred_region
          %s362 = ssub.s32 128, 128
          %363 = vsyncadd %s354, %s362
          %s364 = sadd.s32 %s27, %s26
          %s365 = smul.addr %s364, 128
          %s366 = scalar_lea.hbm %s3, %s365
          %s368 = sshll.u32 %s357, 4
          %s369 = int_to_ptr.vmem [resolvable:$true] %s368
          %371 = dma.vmem_to_hbm [thread:$0]  %s369, 128, %s366, %s354
        $region52: #{tpu_custom_call.1} parent=31 // pred_fallthru
          _
      $region32: #{tpu_custom_call.1} parent=5 // pred_fallthru
        _
      %p372 = scmp.le.s32.totalorder 2, %s16
      // Predicated region
      $region53: #{tpu_custom_call.1} parent=5 // pred_check
        %p373 = pneg %p372
      $region54: #{tpu_custom_call.1} parent=5 // pred_check_branch
        %375 = sbr.rel (%p373) target = $region56
      $region55: #{tpu_custom_call.1} parent=5 // pred_region
        %s376 = ssub.s32 %s16, 2
        // Predicated region
        $region57: #{tpu_custom_call.1} parent=55 // pred_check
          %p377 = pneg %p148
        $region58: #{tpu_custom_call.1} parent=55 // pred_check_branch
          %379 = sbr.rel (%p377) target = $region60
        $region59: #{tpu_custom_call.1} parent=55 // pred_region
          %s380 = sand.u32 %s133, 1
          %s381 = scalar_lea.sflag [#allocation5], %s380
          %s382 = sand.u32 %s133, 1
          %s383 = smul.addr %s382, 8
          %s384 = scalar_lea.vmem [#allocation8], %s383
          %385 = dma.done %s381, 128
        $region60: #{tpu_custom_call.1} parent=55 // pred_fallthru
          _
      $region56: #{tpu_custom_call.1} parent=5 // pred_fallthru
        _
    $region6: #{tpu_custom_call.1} parent=1 // loop_footer
      %s20 = sadd.s32 1, %s16
    $region7: #{tpu_custom_call.1} parent=1 // loop_footer_branch
      %15 = sbr.rel target = $region3
    $region8: #{tpu_custom_call.1} parent=1 // loop_exit
      _
    %386 = vsyncpa [#allocation4], 1
    %s387 = scalar_lea.sflag [#allocation4], 1
    %388 = vsyncpa %s387, 1
    %389 = vsyncpa [#allocation7], 1
    %390 = vsyncpa [#allocation5], 1
    %s391 = scalar_lea.sflag [#allocation5], 1
    %392 = vsyncpa %s391, 1

</llo_original>
